<compile_context>
chip_gen: v5e
topology: v5e:2x2
jax: 0.10.0
libtpu: 0.0.40
codegen_flags: <defaults>
</compile_context>

<pallas_src>
import jax
import jax.numpy as jnp
from jax.experimental import pallas as pl
from jax.experimental.pallas import tpu as pltpu


# ----------------------------------------------------------------------------
# Trace-time hardware queries (best effort, always safe).
# ----------------------------------------------------------------------------
def _vmem_capacity_bytes():
    try:
        cap = int(pltpu.get_tpu_info().vmem_capacity_bytes)
        if cap > 0:
            return cap
    except Exception:
        pass
    try:
        kind = jax.devices()[0].device_kind.lower()
        if "v7" in kind:
            return 64 * 1024 * 1024
        if "v5" in kind or "v6" in kind:
            return 128 * 1024 * 1024
    except Exception:
        pass
    return 64 * 1024 * 1024  # conservative default (v7x-sized)


def _num_tensorcores():
    # v7x has 2 TensorCores per chip; v5e/v6e have 1.
    try:
        if "v7" in jax.devices()[0].device_kind.lower():
            return 2
    except Exception:
        pass
    return 1


def _sub_pack(itemsize):
    return 8 if itemsize >= 4 else (16 if itemsize == 2 else 32)


def _padded_bytes(rows, cols, itemsize):
    """VMEM bytes of a (rows, cols) tile in the (sublane, lane)-padded layout."""
    sub = _sub_pack(itemsize)
    rows_p = -(-rows // sub) * sub
    cols_p = -(-cols // 128) * 128
    return rows_p * cols_p * itemsize


# ----------------------------------------------------------------------------
# Kernels.
# ----------------------------------------------------------------------------
def _make_kernel_3d(inv_hw):
    """Fused SE kernel on a (B, C, HW) block (used when C >= 8)."""

    def kernel(x_ref, w1t_ref, b1_ref, w2t_ref, b2_ref, o_ref):
        x = x_ref[...]                                          # streaming dtype
        # f32-accumulated pool; padded/absent lanes never read (block == full HW)
        m = jnp.sum(x, axis=-1, dtype=jnp.float32) * inv_hw     # (B, C) f32
        y = jnp.dot(m, w1t_ref[...], preferred_element_type=jnp.float32)
        y = jnp.maximum(y + b1_ref[...], 0.0)
        y = jnp.dot(y, w2t_ref[...], preferred_element_type=jnp.float32)
        s = jax.nn.sigmoid(y + b2_ref[...])                     # (B, C) f32
        # gate in the streaming dtype -> no full-block f32 temporary
        o_ref[...] = x * s[:, :, None].astype(o_ref.dtype)

    return kernel


def _make_kernel_2d(inv_hw):
    """Fused SE kernel on a dense (B*C, HW) block (used when C < 8).

    g (B, B*C), gt (B*C, B), d (B*C, C) are precomputed 0/1 matrices that
    regroup per-row means into (B, C) and broadcast the gate back to rows
    without any in-kernel reshape."""

    def kernel(x_ref, w1t_ref, b1_ref, w2t_ref, b2_ref, g_ref, gt_ref, d_ref, o_ref):
        x = x_ref[...]                                                    # (R, HW)
        msum = jnp.sum(x, axis=-1, keepdims=True, dtype=jnp.float32) * inv_hw  # (R, 1)
        p = msum * d_ref[...]                                             # (R, C)
        m = jnp.dot(g_ref[...], p, preferred_element_type=jnp.float32)   # (B, C)
        y = jnp.dot(m, w1t_ref[...], preferred_element_type=jnp.float32)
        y = jnp.maximum(y + b1_ref[...], 0.0)
        y = jnp.dot(y, w2t_ref[...], preferred_element_type=jnp.float32)
        s = jax.nn.sigmoid(y + b2_ref[...])                               # (B, C)
        s_rows = jnp.sum(
            jnp.dot(gt_ref[...], s, preferred_element_type=jnp.float32) * d_ref[...],
            axis=-1, keepdims=True)                                       # (R, 1)
        o_ref[...] = x * s_rows.astype(o_ref.dtype)

    return kernel


def _make_mean_kernel(inv_hw, hw_total, chunk):
    """Chunked fallback pass 1: per-row mean with an output accumulator that is
    resident across the spatial-chunk grid axis."""

    def kernel(x_ref, o_ref):
        k = pl.program_id(1)

        @pl.when(k == 0)
        def _():
            o_ref[...] = jnp.zeros_like(o_ref)

        x = x_ref[...]                                          # (RB, chunk)
        lane = jax.lax.broadcasted_iota(jnp.int32, x.shape, 1)
        valid = (k * chunk + lane) < hw_total                   # mask ragged tail
        x = jnp.where(valid, x, jnp.zeros((), x.dtype))
        o_ref[...] += jnp.sum(x, axis=-1, keepdims=True, dtype=jnp.float32) * inv_hw

    return kernel


def _scale_kernel(x_ref, s_ref, o_ref):
    """Chunked fallback pass 2: per-row gate applied to a spatial chunk."""
    o_ref[...] = x_ref[...] * s_ref[...].astype(o_ref.dtype)


# ----------------------------------------------------------------------------
# Block-size selection.
# ----------------------------------------------------------------------------
def _pick_fused_batch(n, c, hw, itemsize, budget, n_cores, use_2d):
    """Largest B (divisor of N; whole images per block) whose double-buffered
    in/out blocks plus helper matrices fit `budget`.  On multi-core chips we
    prefer >= n_cores grid steps so both TensorCores get work."""

    def block_bytes(b):
        rows = b * c
        if use_2d:
            stream = 4 * _padded_bytes(rows, hw, itemsize)      # 2x in + 2x out
            helpers = 2 * (_padded_bytes(b, rows, 4)            # G
                           + _padded_bytes(rows, b, 4)          # GT
                           + _padded_bytes(rows, c, 4))         # D
            temps = 2 * _padded_bytes(rows, c, 4) + 4 * _padded_bytes(b, c, 4)
            return stream + helpers + temps
        stream = 4 * b * _padded_bytes(c, hw, itemsize)
        return stream + 4 * _padded_bytes(b, c, 4)

    def valid(b):
        if n % b:
            return False
        if use_2d and (b * c) % 8 and b != n:      # rows must pack, or full dim
            return False
        return block_bytes(b) <= budget

    cands = [d for d in range(1, n + 1) if valid(d)]
    if not cands:
        return None
    best = max(cands)
    if n_cores > 1 and n > 1:
        for d in sorted(cands, reverse=True):
            if n // d >= n_cores:
                best = d
                break
    return best


# ----------------------------------------------------------------------------
# Chunked fallback (single image too large for the VMEM budget).
# ----------------------------------------------------------------------------
def _se_chunked(x, w1t, b1r, w2t, b2r, inv_hw, budget, vmem_limit_bytes, cost):
    N, C, H, W = x.shape
    HW = H * W
    dtype = x.dtype
    itemsize = jnp.dtype(dtype).itemsize
    R = N * C
    x2 = x.reshape(R, HW)                       # free view

    rb = R if R <= 256 else 256                 # multiple of 8, or the full dim
    rb_pad = -(-rb // _sub_pack(itemsize)) * _sub_pack(itemsize)
    group_bytes = 4 * rb_pad * 128 * itemsize   # 2x in + 2x out per 128 lanes
    n_groups_total = -(-HW // 128)
    n_groups = max(1, min(n_groups_total, budget // max(group_bytes, 1)))
    chunk = n_groups * 128

    grid_r = -(-R // rb)
    grid_k = -(-HW // chunk)

    means = pl.pallas_call(
        _make_mean_kernel(inv_hw, HW, chunk),
        out_shape=jax.ShapeDtypeStruct((R, 1), jnp.float32),
        grid=(grid_r, grid_k),
        in_specs=[pl.BlockSpec((rb, chunk), lambda r, k: (r, k))],
        out_specs=pl.BlockSpec((rb, 1), lambda r, k: (r, 0)),
        compiler_params=pltpu.CompilerParams(
            dimension_semantics=("parallel", "arbitrary"),
            vmem_limit_bytes=vmem_limit_bytes),
    )(x2)

    # Tiny FC / sigmoid gate in plain JAX (only N*C numbers).
    m = means.reshape(N, C)
    y = jnp.maximum(jnp.dot(m, w1t) + b1r, 0.0)
    s = jax.nn.sigmoid(jnp.dot(y, w2t) + b2r)                   # (N, C) f32
    s_rows = s.reshape(R, 1)

    out = pl.pallas_call(
        _scale_kernel,
        out_shape=jax.ShapeDtypeStruct((R, HW), dtype),
        grid=(grid_r, grid_k),
        in_specs=[pl.BlockSpec((rb, chunk), lambda r, k: (r, k)),
                  pl.BlockSpec((rb, 1), lambda r, k: (r, 0))],
        out_specs=pl.BlockSpec((rb, chunk), lambda r, k: (r, k)),
        compiler_params=pltpu.CompilerParams(
            dimension_semantics=("parallel", "parallel"),
            vmem_limit_bytes=vmem_limit_bytes),
        cost_estimate=cost,
    )(x2, s_rows)
    return out.reshape(N, C, H, W)


# ----------------------------------------------------------------------------
# Public entry point.
# ----------------------------------------------------------------------------
def shift_channel_one_pallas(x, w1, b1, w2, b2, *, block_budget_bytes=None,
                             vmem_limit_bytes=None):
    """x: (N, C, H, W); w1: (Cr, C); b1: (Cr, 1); w2: (C, Cr); b2: (C, 1).
    Streams in x.dtype (f32 or bf16); internal math is f32."""
    N, C, H, W = x.shape
    HW = H * W
    Cr = w1.shape[0]
    dtype = x.dtype
    itemsize = jnp.dtype(dtype).itemsize
    inv_hw = 1.0 / float(HW)

    cap = _vmem_capacity_bytes()
    if block_budget_bytes is None:
        block_budget_bytes = int(0.55 * cap)
    if vmem_limit_bytes is None:
        vmem_limit_bytes = int(0.75 * cap)
    n_cores = _num_tensorcores()

    # Pre-transposed f32 weights (resident in VMEM across the whole grid).
    w1t = jnp.asarray(w1, jnp.float32).T            # (C, Cr)
    w2t = jnp.asarray(w2, jnp.float32).T            # (Cr, C)
    b1r = jnp.asarray(b1, jnp.float32).reshape(1, Cr)
    b2r = jnp.asarray(b2, jnp.float32).reshape(1, C)

    cost = pl.CostEstimate(
        flops=2 * N * C * HW + 4 * N * C * Cr,
        transcendentals=N * C,
        bytes_accessed=2 * N * C * HW * itemsize + 8 * C * Cr,
    )
    cparams = pltpu.CompilerParams(
        dimension_semantics=("parallel",),
        vmem_limit_bytes=vmem_limit_bytes,
    )

    use_2d = C < 8                      # dense sublane packing for tiny C
    B = _pick_fused_batch(N, C, HW, itemsize, block_budget_bytes, n_cores, use_2d)

    if B is not None and use_2d:
        R = B * C
        rows = jnp.arange(R, dtype=jnp.int32)
        bidx = jnp.arange(B, dtype=jnp.int32)
        cidx = jnp.arange(C, dtype=jnp.int32)
        g = (rows[None, :] // C == bidx[:, None]).astype(jnp.float32)    # (B, R)
        gt = (rows[:, None] // C == bidx[None, :]).astype(jnp.float32)   # (R, B)
        d = (rows[:, None] % C == cidx[None, :]).astype(jnp.float32)     # (R, C)
        x2 = x.reshape(N * C, HW)                                        # free view
        out = pl.pallas_call(
            _make_kernel_2d(inv_hw),
            out_shape=jax.ShapeDtypeStruct((N * C, HW), dtype),
            grid=(N // B,),
            in_specs=[
                pl.BlockSpec((R, HW), lambda n: (n, 0)),
                pl.BlockSpec((C, Cr), lambda n: (0, 0)),
                pl.BlockSpec((1, Cr), lambda n: (0, 0)),
                pl.BlockSpec((Cr, C), lambda n: (0, 0)),
                pl.BlockSpec((1, C), lambda n: (0, 0)),
                pl.BlockSpec((B, R), lambda n: (0, 0)),
                pl.BlockSpec((R, B), lambda n: (0, 0)),
                pl.BlockSpec((R, C), lambda n: (0, 0)),
            ],
            out_specs=pl.BlockSpec((R, HW), lambda n: (n, 0)),
            compiler_params=cparams,
            cost_estimate=cost,
        )(x2, w1t, b1r, w2t, b2r, g, gt, d)
        return out.reshape(N, C, H, W)

    if B is not None:
        x3 = x.reshape(N, C, HW)                                         # free view
        out = pl.pallas_call(
            _make_kernel_3d(inv_hw),
            out_shape=jax.ShapeDtypeStruct((N, C, HW), dtype),
            grid=(N // B,),
            in_specs=[
                pl.BlockSpec((B, C, HW), lambda n: (n, 0, 0)),
                pl.BlockSpec((C, Cr), lambda n: (0, 0)),
                pl.BlockSpec((1, Cr), lambda n: (0, 0)),
                pl.BlockSpec((Cr, C), lambda n: (0, 0)),
                pl.BlockSpec((1, C), lambda n: (0, 0)),
            ],
            out_specs=pl.BlockSpec((B, C, HW), lambda n: (n, 0, 0)),
            compiler_params=cparams,
            cost_estimate=cost,
        )(x3, w1t, b1r, w2t, b2r)
        return out.reshape(N, C, H, W)

    # One image does not fit -> spatially chunked two-pass fallback.
    return _se_chunked(x, w1t, b1r, w2t, b2r, inv_hw,
                       block_budget_bytes, vmem_limit_bytes, cost)


# ----------------------------------------------------------------------------
# Reference + tests.
# ----------------------------------------------------------------------------
def init_params(key, in_channels, r):
    cr = in_channels // r
    k1, k2, k3, k4 = jax.random.split(key, 4)
    b1_bound = 1.0 / (in_channels ** 0.5)
    b2_bound = 1.0 / (cr ** 0.5)
    w1 = jax.random.uniform(k1, (cr, in_channels), jnp.float32, -b1_bound, b1_bound)
    b1 = jax.random.uniform(k2, (cr, 1), jnp.float32, -b1_bound, b1_bound)
    w2 = jax.random.uniform(k3, (in_channels, cr), jnp.float32, -b2_bound, b2_bound)
    b2 = jax.random.uniform(k4, (in_channels, 1), jnp.float32, -b2_bound, b2_bound)
    return w1, b1, w2, b2


def reference(x, w1, b1, w2, b2):
    xf = x.astype(jnp.float32)
    m = xf.mean(axis=(2, 3))
    y = jnp.maximum(m @ w1.T + b1[:, 0][None, :], 0.0)
    y = y @ w2.T + b2[:, 0][None, :]
    s = jax.nn.sigmoid(y)
    return s[:, :, None, None] * xf


if __name__ == "__main__":
    key = jax.random.PRNGKey(0)

    # --- main case: C=4 -> dense 2D fused path, f32 -------------------------
    N, C, H, W, r = 2, 4, 16, 16, 2
    kx, kp, key = jax.random.split(key, 3)
    x = jax.random.normal(kx, (N, C, H, W), jnp.float32)
    w1, b1, w2, b2 = init_params(kp, C, r)
    out = jax.block_until_ready(shift_channel_one_pallas(x, w1, b1, w2, b2))
    ref = reference(x, w1, b1, w2, b2)
    assert out.shape == (N, C, H, W)
    assert jnp.allclose(out, ref, atol=1e-5, rtol=1e-5), "f32 2D-path mismatch"

    # --- bf16 streaming on the same case (internal math stays f32) ----------
    x_bf16 = x.astype(jnp.bfloat16)
    out_bf16 = jax.block_until_ready(shift_channel_one_pallas(x_bf16, w1, b1, w2, b2))
    assert out_bf16.dtype == jnp.bfloat16
    assert jnp.allclose(out_bf16.astype(jnp.float32),
                        reference(x_bf16, w1, b1, w2, b2),
                        atol=3e-2, rtol=3e-2), "bf16 mismatch"

    # --- C=8, ragged HW (144) -> 3D fused path, full-dim lane block ---------
    N2, C2, H2, W2, r2 = 2, 8, 12, 12, 2
    kx2, kp2, key = jax.random.split(key, 3)
    x2 = jax.random.normal(kx2, (N2, C2, H2, W2), jnp.float32)
    p2 = init_params(kp2, C2, r2)
    out2 = jax.block_until_ready(shift_channel_one_pallas(x2, *p2))
    assert jnp.allclose(out2, reference(x2, *p2), atol=1e-5, rtol=1e-5), \
        "f32 3D-path mismatch"

    # --- forced chunked fallback (tiny budget): exercises spatial chunking,
    #     ragged-tail masking, and the two-pass mean/scale kernels -----------
    out3 = jax.block_until_ready(
        shift_channel_one_pallas(x2, *p2, block_budget_bytes=1))
    assert jnp.allclose(out3, reference(x2, *p2), atol=1e-5, rtol=1e-5), \
        "chunked-fallback mismatch"

    print("KERNEL_OK")
</pallas_src>

<mosaic_0001>
module attributes {stable_mosaic.version = 11 : i64} {
  func.func @kernel(%arg0: i32, %arg1: memref<8x256xf32, #tpu.memory_space<vmem>>, %arg2: memref<4x2xf32, #tpu.memory_space<vmem>>, %arg3: memref<1x2xf32, #tpu.memory_space<vmem>>, %arg4: memref<2x4xf32, #tpu.memory_space<vmem>>, %arg5: memref<1x4xf32, #tpu.memory_space<vmem>>, %arg6: memref<2x8xf32, #tpu.memory_space<vmem>>, %arg7: memref<8x2xf32, #tpu.memory_space<vmem>>, %arg8: memref<8x4xf32, #tpu.memory_space<vmem>>, %arg9: memref<8x256xf32, #tpu.memory_space<vmem>>) attributes {dimension_semantics = [#tpu.dimension_semantics<parallel>], iteration_bounds = array<i64: 1>, scalar_prefetch = 0 : i64, scratch_operands = 0 : i64, tpu.core_type = #tpu.core_type<tc>, window_params = [{transform_indices = @transform_0, window_bounds = array<i64: 8, 256>}, {pipeline_mode = #tpu.pipeline_mode<synchronous>, transform_indices = @transform_1, window_bounds = array<i64: 4, 2>}, {pipeline_mode = #tpu.pipeline_mode<synchronous>, transform_indices = @transform_2, window_bounds = array<i64: 1, 2>}, {pipeline_mode = #tpu.pipeline_mode<synchronous>, transform_indices = @transform_3, window_bounds = array<i64: 2, 4>}, {pipeline_mode = #tpu.pipeline_mode<synchronous>, transform_indices = @transform_4, window_bounds = array<i64: 1, 4>}, {pipeline_mode = #tpu.pipeline_mode<synchronous>, transform_indices = @transform_5, window_bounds = array<i64: 2, 8>}, {pipeline_mode = #tpu.pipeline_mode<synchronous>, transform_indices = @transform_6, window_bounds = array<i64: 8, 2>}, {pipeline_mode = #tpu.pipeline_mode<synchronous>, transform_indices = @transform_7, window_bounds = array<i64: 8, 4>}, {transform_indices = @transform_8, window_bounds = array<i64: 8, 256>}]} {
    %c0 = arith.constant 0 : index
    %c0_0 = arith.constant 0 : index
    %0 = vector.load %arg1[%c0, %c0_0] : memref<8x256xf32, #tpu.memory_space<vmem>>, vector<8x256xf32>
    %cst = arith.constant dense<0.000000e+00> : vector<8xf32>
    %1 = vector.multi_reduction <add>, %0, %cst [1] : vector<8x256xf32> to vector<8xf32>
    %2 = vector.shape_cast %1 : vector<8xf32> to vector<8x1xf32>
    %cst_1 = arith.constant 3.906250e-03 : f32
    %3 = vector.broadcast %cst_1 : f32 to vector<8x1xf32>
    %4 = arith.mulf %2, %3 : vector<8x1xf32>
    %c0_2 = arith.constant 0 : index
    %c0_3 = arith.constant 0 : index
    %5 = vector.load %arg8[%c0_2, %c0_3] : memref<8x4xf32, #tpu.memory_space<vmem>>, vector<8x4xf32>
    %6 = vector.broadcast %4 : vector<8x1xf32> to vector<8x4xf32>
    %7 = arith.mulf %6, %5 : vector<8x4xf32>
    %c0_4 = arith.constant 0 : index
    %c0_5 = arith.constant 0 : index
    %8 = vector.load %arg6[%c0_4, %c0_5] : memref<2x8xf32, #tpu.memory_space<vmem>>, vector<2x8xf32>
    %cst_6 = arith.constant dense<0.000000e+00> : vector<2x4xf32>
    %9 = tpu.matmul %8, %7, %cst_6 {dimension_numbers = #tpu.dot_dimension_numbers<[1], [0], [0], [1], [0, 0, 1, 1], [], []>} : vector<2x8xf32>, vector<8x4xf32>, vector<2x4xf32> -> vector<2x4xf32>
    %c0_7 = arith.constant 0 : index
    %c0_8 = arith.constant 0 : index
    %10 = vector.load %arg2[%c0_7, %c0_8] : memref<4x2xf32, #tpu.memory_space<vmem>>, vector<4x2xf32>
    %cst_9 = arith.constant dense<0.000000e+00> : vector<2x2xf32>
    %11 = tpu.matmul %9, %10, %cst_9 {dimension_numbers = #tpu.dot_dimension_numbers<[1], [0], [0], [1], [0, 0, 1, 1], [], []>} : vector<2x4xf32>, vector<4x2xf32>, vector<2x2xf32> -> vector<2x2xf32>
    %c0_10 = arith.constant 0 : index
    %c0_11 = arith.constant 0 : index
    %12 = vector.load %arg3[%c0_10, %c0_11] : memref<1x2xf32, #tpu.memory_space<vmem>>, vector<1x2xf32>
    %13 = vector.broadcast %12 : vector<1x2xf32> to vector<2x2xf32>
    %14 = arith.addf %11, %13 : vector<2x2xf32>
    %cst_12 = arith.constant 0.000000e+00 : f32
    %15 = vector.broadcast %cst_12 : f32 to vector<2x2xf32>
    %16 = arith.maximumf %14, %15 : vector<2x2xf32>
    %c0_13 = arith.constant 0 : index
    %c0_14 = arith.constant 0 : index
    %17 = vector.load %arg4[%c0_13, %c0_14] : memref<2x4xf32, #tpu.memory_space<vmem>>, vector<2x4xf32>
    %cst_15 = arith.constant dense<0.000000e+00> : vector<2x4xf32>
    %18 = tpu.matmul %16, %17, %cst_15 {dimension_numbers = #tpu.dot_dimension_numbers<[1], [0], [0], [1], [0, 0, 1, 1], [], []>} : vector<2x2xf32>, vector<2x4xf32>, vector<2x4xf32> -> vector<2x4xf32>
    %c0_16 = arith.constant 0 : index
    %c0_17 = arith.constant 0 : index
    %19 = vector.load %arg5[%c0_16, %c0_17] : memref<1x4xf32, #tpu.memory_space<vmem>>, vector<1x4xf32>
    %20 = vector.broadcast %19 : vector<1x4xf32> to vector<2x4xf32>
    %21 = arith.addf %18, %20 : vector<2x4xf32>
    %22 = arith.negf %21 : vector<2x4xf32>
    %23 = math.exp %22 : vector<2x4xf32>
    %cst_18 = arith.constant 1.000000e+00 : f32
    %24 = vector.broadcast %cst_18 : f32 to vector<2x4xf32>
    %25 = arith.addf %24, %23 : vector<2x4xf32>
    %26 = arith.divf %24, %25 : vector<2x4xf32>
    %c0_19 = arith.constant 0 : index
    %c0_20 = arith.constant 0 : index
    %27 = vector.load %arg7[%c0_19, %c0_20] : memref<8x2xf32, #tpu.memory_space<vmem>>, vector<8x2xf32>
    %cst_21 = arith.constant dense<0.000000e+00> : vector<8x4xf32>
    %28 = tpu.matmul %27, %26, %cst_21 {dimension_numbers = #tpu.dot_dimension_numbers<[1], [0], [0], [1], [0, 0, 1, 1], [], []>} : vector<8x2xf32>, vector<2x4xf32>, vector<8x4xf32> -> vector<8x4xf32>
    %c0_22 = arith.constant 0 : index
    %c0_23 = arith.constant 0 : index
    %29 = vector.load %arg8[%c0_22, %c0_23] : memref<8x4xf32, #tpu.memory_space<vmem>>, vector<8x4xf32>
    %30 = arith.mulf %28, %29 : vector<8x4xf32>
    %cst_24 = arith.constant dense<0.000000e+00> : vector<8xf32>
    %31 = vector.multi_reduction <add>, %30, %cst_24 [1] : vector<8x4xf32> to vector<8xf32>
    %32 = vector.shape_cast %31 : vector<8xf32> to vector<8x1xf32>
    %33 = vector.broadcast %32 : vector<8x1xf32> to vector<8x256xf32>
    %34 = arith.mulf %0, %33 : vector<8x256xf32>
    %c0_25 = arith.constant 0 : index
    %c0_26 = arith.constant 0 : index
    %35 = vector.load %arg9[%c0_25, %c0_26] : memref<8x256xf32, #tpu.memory_space<vmem>>, vector<8x256xf32>
    tpu.vector_store %arg9[%c0_25, %c0_26], %34 {strides = array<i32>} : memref<8x256xf32, #tpu.memory_space<vmem>>, vector<8x256xf32>,
    return
  }
  func.func @transform_0(%arg0: i32) -> (i32, i32) {
    %c0_i32 = arith.constant 0 : i32
    %c0_i32_0 = arith.constant 0 : i32
    return %arg0, %c0_i32 : i32, i32
  }
  func.func @transform_1(%arg0: i32) -> (i32, i32) {
    %c0_i32 = arith.constant 0 : i32
    %c0_i32_0 = arith.constant 0 : i32
    %c0_i32_1 = arith.constant 0 : i32
    return %c0_i32, %c0_i32_0 : i32, i32
  }
  func.func @transform_2(%arg0: i32) -> (i32, i32) {
    %c0_i32 = arith.constant 0 : i32
    %c0_i32_0 = arith.constant 0 : i32
    %c0_i32_1 = arith.constant 0 : i32
    return %c0_i32, %c0_i32_0 : i32, i32
  }
  func.func @transform_3(%arg0: i32) -> (i32, i32) {
    %c0_i32 = arith.constant 0 : i32
    %c0_i32_0 = arith.constant 0 : i32
    %c0_i32_1 = arith.constant 0 : i32
    return %c0_i32, %c0_i32_0 : i32, i32
  }
  func.func @transform_4(%arg0: i32) -> (i32, i32) {
    %c0_i32 = arith.constant 0 : i32
    %c0_i32_0 = arith.constant 0 : i32
    %c0_i32_1 = arith.constant 0 : i32
    return %c0_i32, %c0_i32_0 : i32, i32
  }
  func.func @transform_5(%arg0: i32) -> (i32, i32) {
    %c0_i32 = arith.constant 0 : i32
    %c0_i32_0 = arith.constant 0 : i32
    %c0_i32_1 = arith.constant 0 : i32
    return %c0_i32, %c0_i32_0 : i32, i32
  }
  func.func @transform_6(%arg0: i32) -> (i32, i32) {
    %c0_i32 = arith.constant 0 : i32
    %c0_i32_0 = arith.constant 0 : i32
    %c0_i32_1 = arith.constant 0 : i32
    return %c0_i32, %c0_i32_0 : i32, i32
  }
  func.func @transform_7(%arg0: i32) -> (i32, i32) {
    %c0_i32 = arith.constant 0 : i32
    %c0_i32_0 = arith.constant 0 : i32
    %c0_i32_1 = arith.constant 0 : i32
    return %c0_i32, %c0_i32_0 : i32, i32
  }
  func.func @transform_8(%arg0: i32) -> (i32, i32) {
    %c0_i32 = arith.constant 0 : i32
    %c0_i32_0 = arith.constant 0 : i32
    return %arg0, %c0_i32 : i32, i32
  }
}

</mosaic_0001>

<llo_original>
// kernel: tpu_custom_call.1
$region0: #{tpu_custom_call.1}
  #allocation0 [shape = 'u32[]', space=smem, size = 0x4, offset = 0x4, fixed_abs, tag = 'smem constant byte address 0x4 - core index']
  #allocation1 [shape = 'u32[72,128]{1,0:T(1,128)}', space=vmem, size = 0x9000, scoped, tag = 'internal scratch']
  %s0 = inlined_call_operand.vmem [shape: f32[8,256], index: 0, kind: input, shape index: {}]
  %s1 = inlined_call_operand.vmem [shape: f32[4,2], index: 1, kind: input, shape index: {}]
  %s2 = inlined_call_operand.vmem [shape: f32[1,2], index: 2, kind: input, shape index: {}]
  %s3 = inlined_call_operand.vmem [shape: f32[2,4], index: 3, kind: input, shape index: {}]
  %s4 = inlined_call_operand.vmem [shape: f32[1,4], index: 4, kind: input, shape index: {}]
  %s5 = inlined_call_operand.vmem [shape: f32[2,8], index: 5, kind: input, shape index: {}]
  %s6 = inlined_call_operand.vmem [shape: f32[8,2], index: 6, kind: input, shape index: {}]
  %s7 = inlined_call_operand.vmem [shape: f32[8,4], index: 7, kind: input, shape index: {}]
  %s8 = inlined_call_operand.hbm [shape: f32[8,256], index: 8, kind: output, shape index: {}]
  %s9 = sld [smem:[#allocation0]]
  $region42: #{tpu_custom_call.1} parent=0
    _
  %s11 = ssub.s32 1, %s9
  %s12 = scalar_select 0, %s11, %s9
  $region1: #{tpu_custom_call.1} parent=0
    #allocation2 [shape = 'u8[8192]{0}', space=vmem, size = 0x2000, scoped, tag = 'output window, operand 0, single buffered']
    #allocation3 [shape = 's32[1]{0}', space=sflag, size = 0x4, scoped, tag = 'scoped memory for tpu_custom_call.1']
    %13 = vsyncpa [#allocation3], 0
    // Predicated region
    $region2: #{tpu_custom_call.1} parent=1 // pred_check
      _
    $region3: #{tpu_custom_call.1} parent=1 // pred_check_branch
      %15 = sbr.rel (0) target = $region5
    $region4: #{tpu_custom_call.1} parent=1 // pred_region
      _
    $region5: #{tpu_custom_call.1} parent=1 // pred_fallthru
      _
    // Predicated region
    $region6: #{tpu_custom_call.1} parent=1 // pred_check
      _
    $region7: #{tpu_custom_call.1} parent=1 // pred_check_branch
      %17 = sbr.rel (0) target = $region9
    $region8: #{tpu_custom_call.1} parent=1 // pred_region
      _
    $region9: #{tpu_custom_call.1} parent=1 // pred_fallthru
      _
    // Predicated region
    $region10: #{tpu_custom_call.1} parent=1 // pred_check
      _
    $region11: #{tpu_custom_call.1} parent=1 // pred_check_branch
      %19 = sbr.rel (0) target = $region13
    $region12: #{tpu_custom_call.1} parent=1 // pred_region
      _
    $region13: #{tpu_custom_call.1} parent=1 // pred_fallthru
      _
    // Predicated region
    $region14: #{tpu_custom_call.1} parent=1 // pred_check
      _
    $region15: #{tpu_custom_call.1} parent=1 // pred_check_branch
      %21 = sbr.rel (0) target = $region17
    $region16: #{tpu_custom_call.1} parent=1 // pred_region
      _
    $region17: #{tpu_custom_call.1} parent=1 // pred_fallthru
      _
    // Predicated region
    $region18: #{tpu_custom_call.1} parent=1 // pred_check
      _
    $region19: #{tpu_custom_call.1} parent=1 // pred_check_branch
      %23 = sbr.rel (0) target = $region21
    $region20: #{tpu_custom_call.1} parent=1 // pred_region
      _
    $region21: #{tpu_custom_call.1} parent=1 // pred_fallthru
      _
    // Predicated region
    $region22: #{tpu_custom_call.1} parent=1 // pred_check
      _
    $region23: #{tpu_custom_call.1} parent=1 // pred_check_branch
      %25 = sbr.rel (0) target = $region25
    $region24: #{tpu_custom_call.1} parent=1 // pred_region
      _
    $region25: #{tpu_custom_call.1} parent=1 // pred_fallthru
      _
    // Predicated region
    $region26: #{tpu_custom_call.1} parent=1 // pred_check
      _
    $region27: #{tpu_custom_call.1} parent=1 // pred_check_branch
      %27 = sbr.rel (0) target = $region29
    $region28: #{tpu_custom_call.1} parent=1 // pred_region
      _
    $region29: #{tpu_custom_call.1} parent=1 // pred_fallthru
      _
    // Predicated region
    $region30: #{tpu_custom_call.1} parent=1 // pred_check
      _
    $region31: #{tpu_custom_call.1} parent=1 // pred_check_branch
      %29 = sbr.rel (0) target = $region33
    $region32: #{tpu_custom_call.1} parent=1 // pred_region
      _
    $region33: #{tpu_custom_call.1} parent=1 // pred_fallthru
      _
    %v30 = vld [vmem:[%s0] sm:$0xff]
    %v31 = vld [vmem:[%s0 + $0x8] sm:$0xff]
    %v32 = vadd.f32 %v30, %v31
    %33 = vadd.xlane.f32.xlu0 %v32
    %v34 = vpop.xlane.xlu0 %33
    %v35 = vmul.f32 %v34, 0.00390625
    %v36 = vld [vmem:[%s7] sm:$0xff]
    %v37 = vmul.f32 %v35, %v36
    %v38 = vld [vmem:[%s5] sm:$0x3]
    %vm39 = vcmask 64512
    %v41 = vsel %vm39, %v38, 0
    %43 = vmatpush.msra.mxu0 0.0
    %44 = vmatpush.msra.mxu0 0.0
    %45 = vmatpush.msra.mxu0 0.0
    %46 = vmatpush.msra.mxu0 0.0
    %47 = vmatpush.msra.mxu0 0.0
    %48 = vmatpush.msra.mxu0 0.0
    %49 = vmatpush.msra.mxu0 0.0
    %50 = vmatpush.msra.mxu0 0.0
    %51 = vmatpush.msra.mxu0 0.0
    %52 = vmatpush.msra.mxu0 0.0
    %53 = vmatpush.msra.mxu0 0.0
    %54 = vmatpush.msra.mxu0 0.0
    %55 = vmatpush.msra.mxu0 0.0
    %56 = vmatpush.msra.mxu0 0.0
    %57 = vmatpush.msra.mxu0 0.0
    %58 = vmatpush.msra.mxu0 %v37
    %59 = vmatmul.f32.gmra.mxu0 %v41
    %v60 = vpop.f32.mrf.mxu0
    %v61 = vadd.f32 0.0, %v60
    %62 = vdwg.mxu0
    %v63 = vld [vmem:[%s1] sm:$0xf]
    %v64 = vld [vmem:[%s2] sm:$0x1]
    %v66 = vperm.slane %v64, 0
    %vm68 = vcmask 31744
    %v70 = vsel %vm68, %v61, 0
    %vm72 = vcmask 1043456
    %v74 = vsel %vm72, %v63, 0
    %76 = vmatpush.msra.mxu0 0.0
    %77 = vmatpush.msra.mxu0 0.0
    %78 = vmatpush.msra.mxu0 0.0
    %79 = vmatpush.msra.mxu0 0.0
    %80 = vmatpush.msra.mxu0 0.0
    %81 = vmatpush.msra.mxu0 0.0
    %82 = vmatpush.msra.mxu0 0.0
    %83 = vmatpush.msra.mxu0 0.0
    %84 = vmatpush.msra.mxu0 0.0
    %85 = vmatpush.msra.mxu0 0.0
    %86 = vmatpush.msra.mxu0 0.0
    %87 = vmatpush.msra.mxu0 0.0
    %88 = vmatpush.msra.mxu0 0.0
    %89 = vmatpush.msra.mxu0 0.0
    %90 = vmatpush.msra.mxu0 0.0
    %91 = vmatpush.msra.mxu0 %v74
    %92 = vmatmul.f32.gmra.mxu0 %v70
    %v93 = vpop.f32.mrf.mxu0
    %v94 = vadd.f32 %v66, %v93
    %95 = vdwg.mxu0
    %v96 = vmax.f32 %v94, 0.0
    %v97 = vld [vmem:[%s3] sm:$0x3]
    %v98 = vld [vmem:[%s4] sm:$0x1]
    %v100 = vperm.slane %v98, 0
    %vm102 = vcmask 15360
    %v104 = vsel %vm102, %v96, 0
    %vm106 = vcmask 1041408
    %v108 = vsel %vm106, %v97, 0
    %110 = vmatpush.msra.mxu0 0.0
    %111 = vmatpush.msra.mxu0 0.0
    %112 = vmatpush.msra.mxu0 0.0
    %113 = vmatpush.msra.mxu0 0.0
    %114 = vmatpush.msra.mxu0 0.0
    %115 = vmatpush.msra.mxu0 0.0
    %116 = vmatpush.msra.mxu0 0.0
    %117 = vmatpush.msra.mxu0 0.0
    %118 = vmatpush.msra.mxu0 0.0
    %119 = vmatpush.msra.mxu0 0.0
    %120 = vmatpush.msra.mxu0 0.0
    %121 = vmatpush.msra.mxu0 0.0
    %122 = vmatpush.msra.mxu0 0.0
    %123 = vmatpush.msra.mxu0 0.0
    %124 = vmatpush.msra.mxu0 0.0
    %125 = vmatpush.msra.mxu0 %v108
    %126 = vmatmul.f32.gmra.mxu0 %v104
    %v127 = vpop.f32.mrf.mxu0
    %v128 = vadd.f32 %v100, %v127
    %129 = vdwg.mxu0
    %v130 = vxor.u32 %v128, 2147483648
    %v131 = vmul.f32 %v130, 1.442695
    %v132 = vpow.pop %v131
    %v133 = vadd.f32 %v132, 1.0
    %v134 = vrcp.pop %v133
    %v135 = vmul.f32 %v133, %v134
    %v136 = vsub.f32 1.0, %v135
    %v137 = vmul.f32 %v134, %v136
    %v138 = vadd.f32 %v134, %v137
    %vm139 = vweird.f32 %v133
    %vm140 = vweird.f32 %v134
    %vm141 = vmor %vm139, %vm140
    %v142 = vsel %vm141, %v134, %v138
    %v143 = vand.u32 2147483647, %v133
    %vm144 = vcmp.eq.f32.partialorder %v143, 8.507059e+37
    %v145 = vand.u32 %v133, 2147483648
    %v146 = vor.u32 1.1754944e-38, %v145
    %v147 = vsel %vm144, %v146, %v142
    %v148 = vmul.f32 1.0, %v147
    %v149 = vld [vmem:[%s6] sm:$0xff]
    %v151 = vsel %vm102, %v149, 0
    %v154 = vsel %vm106, %v148, 0
    %156 = vmatpush.msra.mxu0 0.0
    %157 = vmatpush.msra.mxu0 0.0
    %158 = vmatpush.msra.mxu0 0.0
    %159 = vmatpush.msra.mxu0 0.0
    %160 = vmatpush.msra.mxu0 0.0
    %161 = vmatpush.msra.mxu0 0.0
    %162 = vmatpush.msra.mxu0 0.0
    %163 = vmatpush.msra.mxu0 0.0
    %164 = vmatpush.msra.mxu0 0.0
    %165 = vmatpush.msra.mxu0 0.0
    %166 = vmatpush.msra.mxu0 0.0
    %167 = vmatpush.msra.mxu0 0.0
    %168 = vmatpush.msra.mxu0 0.0
    %169 = vmatpush.msra.mxu0 0.0
    %170 = vmatpush.msra.mxu0 0.0
    %171 = vmatpush.msra.mxu0 %v154
    %172 = vmatmul.f32.gmra.mxu0 %v151
    %v173 = vpop.f32.mrf.mxu0
    %v174 = vadd.f32 0.0, %v173
    %175 = vdwg.mxu0
    %v176 = vmul.f32 %v174, %v36
    %v177 = vsel %vm68, %v176, 0.0
    %178 = vadd.xlane.f32.xlu0 %v177
    %v179 = vpop.xlane.xlu0 %178
    %v180 = vmul.f32 %v30, %v179
    %v181 = vmul.f32 %v31, %v179
    %182 = vst [vmem:[#allocation2] sm:$0xff] %v180
    %183 = vst [vmem:[#allocation2 + $0x8] sm:$0xff] %v181
    // Predicated region
    $region34: #{tpu_custom_call.1} parent=1 // pred_check
      _
    $region35: #{tpu_custom_call.1} parent=1 // pred_check_branch
      %185 = sbr.rel (0) target = $region37
    $region36: #{tpu_custom_call.1} parent=1 // pred_region
      %187 = vsyncadd [#allocation3], 0
      %s189 = sshll.u32 [#allocation2], 4
      %s190 = int_to_ptr.vmem [resolvable:$true] %s189
      %s191 = sshll.u32 %s8, 4
      %s192 = int_to_ptr.hbm [resolvable:$true] %s191
      %194 = dma.vmem_to_hbm [thread:$0]  %s190, 256, %s192, [#allocation3]
    $region37: #{tpu_custom_call.1} parent=1 // pred_fallthru
      _
    // Predicated region
    $region38: #{tpu_custom_call.1} parent=1 // pred_check
      _
    $region39: #{tpu_custom_call.1} parent=1 // pred_check_branch
      %196 = sbr.rel (0) target = $region41
    $region40: #{tpu_custom_call.1} parent=1 // pred_region
      %198 = dma.done [#allocation3], 256
    $region41: #{tpu_custom_call.1} parent=1 // pred_fallthru
      _
    %199 = vsyncpa [#allocation3], 1

</llo_original>
